<compile_context>
chip_gen: v7x
topology: tpu7x:2x2x1
jax: 0.10.0
libtpu: 0.0.40
codegen_flags: <defaults>
</compile_context>

<pallas_src>
import functools

import jax
import jax.numpy as jnp
from jax.experimental import pallas as pl
from jax.experimental.pallas import tpu as pltpu


def _round_up(x, m):
    return ((x + m - 1) // m) * m


def _apply_activation(y, activation):
    if activation == "relu":
        return jnp.maximum(y, 0.0)
    if activation == "tanh":
        return jnp.tanh(y)
    return y  # identity, matches `activation or (lambda x: x)`


# ---------------------------------------------------------------------------
# Kernels
# ---------------------------------------------------------------------------
def _mlp_kernel_single_k(x_ref, w_ref, b_ref, o_ref, *, activation):
    """Whole K in one tile: no accumulator scratch, write the result directly."""
    y = jnp.dot(x_ref[...], w_ref[...], preferred_element_type=jnp.float32)
    y = y + b_ref[...]  # broadcast (1, tn) over rows
    o_ref[...] = _apply_activation(y, activation).astype(o_ref.dtype)


def _mlp_kernel_multi_k(x_ref, w_ref, b_ref, o_ref, acc_ref, *, activation):
    """K-reduction path: f32 VMEM accumulator resident across the K grid axis."""
    k = pl.program_id(2)

    @pl.when(k == 0)
    def _():
        acc_ref[...] = jnp.zeros_like(acc_ref)

    # Weight is pre-transposed to (tk, tn), so this is a plain A @ B on the MXU.
    acc_ref[...] += jnp.dot(x_ref[...], w_ref[...],
                            preferred_element_type=jnp.float32)

    @pl.when(k == pl.num_programs(2) - 1)
    def _():
        y = acc_ref[...] + b_ref[...]
        o_ref[...] = _apply_activation(y, activation).astype(o_ref.dtype)


# ---------------------------------------------------------------------------
# Tile / VMEM selection
# ---------------------------------------------------------------------------
def _vmem_budget_bytes():
    """Generation-aware VMEM budget: ~96 MiB on v5e/v6e, ~48 MiB on v7x."""
    try:
        info = pltpu.get_tpu_info()
        cap = int(getattr(info, "vmem_capacity_bytes", 64 << 20))
    except Exception:
        cap = 64 << 20  # conservative: v7x per-TC VMEM
    return int(min(cap * 3 // 4, 100 << 20))


# Candidates in decreasing VMEM footprint; the first that fits the budget wins.
_TILE_CANDIDATES = (
    (512, 2048, 2048),
    (512, 1024, 2048),
    (512, 1024, 1024),
    (256, 1024, 1024),
    (256, 512, 1024),
    (256, 256, 512),
    (128, 256, 512),
    (128, 128, 512),
    (64, 128, 256),
    (8, 128, 128),
)


def _tile_vmem_bytes(tm, tn, tk, itemsize):
    # double-buffered x / w / bias / out tiles + f32 accumulator scratch
    return (itemsize * (2 * tm * tk + 2 * tk * tn + 2 * tn + 2 * tm * tn)
            + 4 * tm * tn)


def _pick_tiles(M, N, K, itemsize, budget, sublane):
    m_cap = _round_up(M, sublane)
    n_cap = _round_up(N, 128)
    k_cap = _round_up(K, 128)
    for tm, tn, tk in _TILE_CANDIDATES:
        tm_c = min(tm, m_cap)
        tn_c = min(tn, n_cap)
        tk_c = min(tk, k_cap)
        if _tile_vmem_bytes(tm_c, tn_c, tk_c, itemsize) + (6 << 20) <= budget:
            return tm_c, tn_c, tk_c
    return min(sublane, m_cap), min(128, n_cap), min(128, k_cap)


# ---------------------------------------------------------------------------
# Wrapper
# ---------------------------------------------------------------------------
def mlp_layer(x, weight, bias, activation=None, use_bf16=False, tiles=None):
    """Pallas MLPLayer.forward: activation(x @ weight.T + bias).

    x:        (M, K) input (batch, input_size)
    weight:   (N, K) nn.Linear layout (out_features, in_features)
    bias:     (N,)
    use_bf16: opt-in cast of the MXU inputs to bfloat16 (f32 accumulation).
              Changes numerics — off by default.
    tiles:    optional (tm, tn, tk) override (mainly for testing).
    """
    M, K = x.shape
    N, K2 = weight.shape
    assert K == K2, "input_size mismatch"
    out_dtype = x.dtype

    compute_dtype = jnp.bfloat16 if use_bf16 else x.dtype
    itemsize = jnp.dtype(compute_dtype).itemsize
    sublane = 16 if itemsize == 2 else 8

    budget = _vmem_budget_bytes()
    if tiles is None:
        tm, tn, tk = _pick_tiles(M, N, K, itemsize, budget, sublane)
        # v7x megacore: make sure the parallel grid has >=2 steps when the
        # problem would otherwise collapse to a single (i, j) tile.
        if (_round_up(M, sublane) <= tm and _round_up(N, 128) <= tn
                and tn >= 256):
            tn = _round_up(tn // 2, 128)
    else:
        tm, tn, tk = tiles
        tm = min(tm, _round_up(M, sublane))
        tn = min(tn, _round_up(N, 128))
        tk = min(tk, _round_up(K, 128))

    Mp, Np, Kp = _round_up(M, tm), _round_up(N, tn), _round_up(K, tk)

    # Zero padding is exact: padded K columns contribute 0 to the dot; padded
    # M rows / N columns are sliced off.  The weight transpose is a one-time
    # wrapper copy (amortized over calls); the pad is fused into that copy so
    # no extra full-weight pad pass is added for aligned shapes.
    xp = x.astype(compute_dtype)
    if (Mp, Kp) != (M, K):
        xp = jnp.pad(xp, ((0, Mp - M), (0, Kp - K)))
    wt = weight.T.astype(compute_dtype)               # (K, N)
    if (Kp, Np) != (K, N):
        wt = jnp.pad(wt, ((0, Kp - K), (0, Np - N)))  # (Kp, Np)
    bp = bias.astype(jnp.float32).reshape(1, N)
    if Np != N:
        bp = jnp.pad(bp, ((0, 0), (0, Np - N)))

    flops = 2 * Mp * Np * Kp
    transcendentals = Mp * Np if activation == "tanh" else 0
    bytes_accessed = (itemsize * (Mp * Kp + Kp * Np) + 4 * Np
                      + jnp.dtype(out_dtype).itemsize * Mp * Np)
    cost = pl.CostEstimate(flops=flops, transcendentals=transcendentals,
                           bytes_accessed=bytes_accessed)

    vmem_limit = int(min(max(_tile_vmem_bytes(tm, tn, tk, itemsize) + (6 << 20),
                             32 << 20), budget))

    if Kp <= tk:
        # Single-K-step fast path: no accumulator scratch, no init/copy passes.
        grid = (Mp // tm, Np // tn)
        out = pl.pallas_call(
            functools.partial(_mlp_kernel_single_k, activation=activation),
            out_shape=jax.ShapeDtypeStruct((Mp, Np), out_dtype),
            grid_spec=pltpu.PrefetchScalarGridSpec(
                num_scalar_prefetch=0,
                grid=grid,
                in_specs=[
                    pl.BlockSpec((tm, Kp), lambda i, j: (i, 0)),  # x row tile
                    pl.BlockSpec((Kp, tn), lambda i, j: (0, j)),  # W^T tile
                    pl.BlockSpec((1, tn), lambda i, j: (0, j)),   # bias tile
                ],
                out_specs=pl.BlockSpec((tm, tn), lambda i, j: (i, j)),
            ),
            compiler_params=pltpu.CompilerParams(
                dimension_semantics=("parallel", "parallel"),
                vmem_limit_bytes=vmem_limit,
            ),
            cost_estimate=cost,
        )(xp, wt, bp)
    else:
        grid = (Mp // tm, Np // tn, Kp // tk)
        out = pl.pallas_call(
            functools.partial(_mlp_kernel_multi_k, activation=activation),
            out_shape=jax.ShapeDtypeStruct((Mp, Np), out_dtype),
            grid_spec=pltpu.PrefetchScalarGridSpec(
                num_scalar_prefetch=0,
                grid=grid,
                in_specs=[
                    pl.BlockSpec((tm, tk), lambda i, j, k: (i, k)),  # x tile
                    pl.BlockSpec((tk, tn), lambda i, j, k: (k, j)),  # W^T tile
                    pl.BlockSpec((1, tn), lambda i, j, k: (0, j)),   # bias
                ],
                out_specs=pl.BlockSpec((tm, tn), lambda i, j, k: (i, j)),
                scratch_shapes=[pltpu.VMEM((tm, tn), jnp.float32)],
            ),
            compiler_params=pltpu.CompilerParams(
                # M/N parallel (megacore sharding), K reduction arbitrary & last.
                dimension_semantics=("parallel", "parallel", "arbitrary"),
                vmem_limit_bytes=vmem_limit,
            ),
            cost_estimate=cost,
        )(xp, wt, bp)

    if (Mp, Np) != (M, N):
        out = out[:M, :N]
    return out


def mlp_ref(x, weight, bias, activation=None):
    y = x @ weight.T + bias
    if activation == "relu":
        y = jnp.maximum(y, 0.0)
    elif activation == "tanh":
        y = jnp.tanh(y)
    return y


if __name__ == "__main__":
    key = jax.random.PRNGKey(0)
    kx, kw, kb = jax.random.split(key, 3)

    # Small shapes consistent with the module: batch=8, input_size=32, hidden=64.
    M, K, N = 8, 32, 64
    x = jax.random.normal(kx, (M, K), dtype=jnp.float32)
    # TODO(synk): orthonormal_initializer from reset_parameters not reproduced;
    # deterministic Gaussian init used (forward semantics are unaffected).
    weight = jax.random.normal(kw, (N, K), dtype=jnp.float32) * 0.1
    bias = jax.random.normal(kb, (N,), dtype=jnp.float32) * 0.1

    # Identity (module default), ReLU, and tanh activations (single-K fast path).
    y_id = jax.block_until_ready(mlp_layer(x, weight, bias, activation=None))
    y_relu = jax.block_until_ready(mlp_layer(x, weight, bias, activation="relu"))
    y_tanh = jax.block_until_ready(mlp_layer(x, weight, bias, activation="tanh"))
    assert y_id.shape == (M, N) and y_id.dtype == jnp.float32
    assert jnp.allclose(y_id, mlp_ref(x, weight, bias, None), atol=1e-5, rtol=1e-5)
    assert jnp.allclose(y_relu, mlp_ref(x, weight, bias, "relu"), atol=1e-5, rtol=1e-5)
    assert jnp.allclose(y_tanh, mlp_ref(x, weight, bias, "tanh"), atol=1e-5, rtol=1e-5)

    # Ragged (non tile-aligned) shapes exercise the padding + slicing path.
    M2, K2, N2 = 10, 50, 70
    x2 = jax.random.normal(kx, (M2, K2), dtype=jnp.float32)
    w2 = jax.random.normal(kw, (N2, K2), dtype=jnp.float32) * 0.1
    b2 = jax.random.normal(kb, (N2,), dtype=jnp.float32) * 0.1
    y2 = jax.block_until_ready(mlp_layer(x2, w2, b2, activation="relu"))
    assert y2.shape == (M2, N2)
    assert jnp.allclose(y2, mlp_ref(x2, w2, b2, "relu"), atol=1e-5, rtol=1e-5)

    # Multi-K-step accumulator path (tile override forces K // tk = 2) must
    # match the single-K fast path bit-for-bit up to accumulation grouping.
    M3, K3, N3 = 16, 256, 128
    x3 = jax.random.normal(kx, (M3, K3), dtype=jnp.float32)
    w3 = jax.random.normal(kw, (N3, K3), dtype=jnp.float32) * 0.1
    b3 = jax.random.normal(kb, (N3,), dtype=jnp.float32) * 0.1
    y3_multi = jax.block_until_ready(
        mlp_layer(x3, w3, b3, activation="tanh", tiles=(16, 128, 128)))
    y3_single = jax.block_until_ready(mlp_layer(x3, w3, b3, activation="tanh"))
    assert jnp.allclose(y3_multi, y3_single, atol=1e-5, rtol=1e-5)
    assert jnp.allclose(y3_multi, mlp_ref(x3, w3, b3, "tanh"), atol=2e-2, rtol=2e-2)

    # Megacore N-split path: single-tile problem with tn >= 256 gets split.
    M4, K4, N4 = 64, 64, 512
    x4 = jax.random.normal(kx, (M4, K4), dtype=jnp.float32)
    w4 = jax.random.normal(kw, (N4, K4), dtype=jnp.float32) * 0.1
    b4 = jax.random.normal(kb, (N4,), dtype=jnp.float32) * 0.1
    y4 = jax.block_until_ready(mlp_layer(x4, w4, b4, activation="relu"))
    assert y4.shape == (M4, N4)
    assert jnp.allclose(y4, mlp_ref(x4, w4, b4, "relu"), atol=1e-4, rtol=1e-4)

    # Opt-in bf16 MXU inputs (f32 accumulation) — looser tolerance by design.
    y_bf16 = jax.block_until_ready(
        mlp_layer(x, weight, bias, activation="relu", use_bf16=True))
    assert jnp.allclose(y_bf16, mlp_ref(x, weight, bias, "relu"),
                        atol=5e-2, rtol=5e-2)

    print("KERNEL_OK")
</pallas_src>

<mosaic_0001>
module attributes {stable_mosaic.version = 11 : i64} {
  func.func @_mlp_kernel_single_k(%arg0: i32, %arg1: i32, %arg2: memref<8x128xf32, #tpu.memory_space<vmem>>, %arg3: memref<128x128xf32, #tpu.memory_space<vmem>>, %arg4: memref<1x128xf32, #tpu.memory_space<vmem>>, %arg5: memref<8x128xf32, #tpu.memory_space<vmem>>) attributes {dimension_semantics = [#tpu.dimension_semantics<parallel>, #tpu.dimension_semantics<parallel>], iteration_bounds = array<i64: 1, 1>, scalar_prefetch = 0 : i64, scratch_operands = 0 : i64, tpu.core_type = #tpu.core_type<tc>, window_params = [{transform_indices = @transform_0, window_bounds = array<i64: 8, 128>}, {transform_indices = @transform_1, window_bounds = array<i64: 128, 128>}, {transform_indices = @transform_2, window_bounds = array<i64: 1, 128>}, {transform_indices = @transform_3, window_bounds = array<i64: 8, 128>}]} {
    %c0 = arith.constant 0 : index
    %c0_0 = arith.constant 0 : index
    %0 = vector.load %arg2[%c0, %c0_0] : memref<8x128xf32, #tpu.memory_space<vmem>>, vector<8x128xf32>
    %c0_1 = arith.constant 0 : index
    %c0_2 = arith.constant 0 : index
    %1 = vector.load %arg3[%c0_1, %c0_2] : memref<128x128xf32, #tpu.memory_space<vmem>>, vector<128x128xf32>
    %cst = arith.constant dense<0.000000e+00> : vector<8x128xf32>
    %2 = tpu.matmul %0, %1, %cst {dimension_numbers = #tpu.dot_dimension_numbers<[1], [0], [0], [1], [0, 0, 1, 1], [], []>} : vector<8x128xf32>, vector<128x128xf32>, vector<8x128xf32> -> vector<8x128xf32>
    %c0_3 = arith.constant 0 : index
    %c0_4 = arith.constant 0 : index
    %3 = vector.load %arg4[%c0_3, %c0_4] : memref<1x128xf32, #tpu.memory_space<vmem>>, vector<1x128xf32>
    %4 = vector.broadcast %3 : vector<1x128xf32> to vector<8x128xf32>
    %5 = arith.addf %2, %4 : vector<8x128xf32>
    %c0_5 = arith.constant 0 : index
    %c0_6 = arith.constant 0 : index
    %6 = vector.load %arg5[%c0_5, %c0_6] : memref<8x128xf32, #tpu.memory_space<vmem>>, vector<8x128xf32>
    tpu.vector_store %arg5[%c0_5, %c0_6], %5 {strides = array<i32>} : memref<8x128xf32, #tpu.memory_space<vmem>>, vector<8x128xf32>,
    return
  }
  func.func @transform_0(%arg0: i32, %arg1: i32) -> (i32, i32) {
    %c0_i32 = arith.constant 0 : i32
    %c0_i32_0 = arith.constant 0 : i32
    return %arg0, %c0_i32 : i32, i32
  }
  func.func @transform_1(%arg0: i32, %arg1: i32) -> (i32, i32) {
    %c0_i32 = arith.constant 0 : i32
    %c0_i32_0 = arith.constant 0 : i32
    return %c0_i32, %arg1 : i32, i32
  }
  func.func @transform_2(%arg0: i32, %arg1: i32) -> (i32, i32) {
    %c0_i32 = arith.constant 0 : i32
    %c0_i32_0 = arith.constant 0 : i32
    return %c0_i32, %arg1 : i32, i32
  }
  func.func @transform_3(%arg0: i32, %arg1: i32) -> (i32, i32) {
    %c0_i32 = arith.constant 0 : i32
    return %arg0, %arg1 : i32, i32
  }
}

</mosaic_0001>

<llo_original>
// kernel: tpu_custom_call.1
$region0: #{tpu_custom_call.1}
  #allocation0 [shape = 'u32[]', space=smem, size = 0x4, offset = 0x4, fixed_abs, tag = 'smem constant byte address 0x4 - core index']
  #allocation1 [shape = 'u32[144,128]{1,0:T(1,128)}', space=vmem, size = 0x12000, scoped, tag = 'internal scratch']
  %s0 = inlined_call_operand.hbm [shape: f32[8,128], index: 0, kind: input, shape index: {}]
  %s1 = inlined_call_operand.hbm [shape: f32[128,128], index: 1, kind: input, shape index: {}]
  %s2 = inlined_call_operand.vmem [shape: f32[1,128], index: 2, kind: input, shape index: {}]
  %s3 = inlined_call_operand.hbm [shape: f32[8,128], index: 3, kind: output, shape index: {}]
  %s4 = sld [smem:[#allocation0]]
  $region30: #{tpu_custom_call.1} parent=0
    _
  %s6 = ssub.s32 1, %s4
  %s7 = scalar_select 0, %s6, %s4
  $region1: #{tpu_custom_call.1} parent=0
    #allocation2 [shape = 'u8[4096]{0}', space=vmem, size = 0x1000, scoped, tag = 'input window, operand 0, single buffered']
    #allocation3 [shape = 's32[1]{0}', space=sflag, size = 0x4, scoped, tag = 'scoped memory for tpu_custom_call.1']
    #allocation4 [shape = 's32[1]{0}', space=sflag, size = 0x4, scoped, tag = 'scoped memory for tpu_custom_call.1']
    #allocation5 [shape = 'u8[65536]{0}', space=vmem, size = 0x10000, scoped, tag = 'input window, operand 1, single buffered']
    #allocation6 [shape = 's32[1]{0}', space=sflag, size = 0x4, scoped, tag = 'scoped memory for tpu_custom_call.1']
    #allocation7 [shape = 'u8[4096]{0}', space=vmem, size = 0x1000, scoped, tag = 'output window, operand 0, single buffered']
    %8 = vsyncpa [#allocation3], 0
    %9 = vsyncpa [#allocation6], 0
    %10 = vsyncpa [#allocation4], 0
    // Predicated region
    $region2: #{tpu_custom_call.1} parent=1 // pred_check
      _
    $region3: #{tpu_custom_call.1} parent=1 // pred_check_branch
      %12 = sbr.rel (0) target = $region5
    $region4: #{tpu_custom_call.1} parent=1 // pred_region
      %s14 = ssub.s32 128, 128
      %15 = vsyncadd [#allocation3], %s14
      %s17 = sshll.u32 [#allocation2], 4
      %s18 = int_to_ptr.vmem [resolvable:$true] %s17
      %20 = dma.hbm_to_vmem [thread:$0]  %s0, 128, %s18, [#allocation3]
    $region5: #{tpu_custom_call.1} parent=1 // pred_fallthru
      _
    // Predicated region
    $region6: #{tpu_custom_call.1} parent=1 // pred_check
      _
    $region7: #{tpu_custom_call.1} parent=1 // pred_check_branch
      %22 = sbr.rel (0) target = $region9
    $region8: #{tpu_custom_call.1} parent=1 // pred_region
      %s24 = ssub.s32 2048, 2048
      %25 = vsyncadd [#allocation6], %s24
      %s26 = sshll.u32 [#allocation5], 4
      %s27 = int_to_ptr.vmem [resolvable:$true] %s26
      %32 = dma.hbm_to_vmem [thread:$0]  %s1, 2048, %s27, [#allocation6], 128, 128, 8
    $region9: #{tpu_custom_call.1} parent=1 // pred_fallthru
      _
    // Predicated region
    $region10: #{tpu_custom_call.1} parent=1 // pred_check
      _
    $region11: #{tpu_custom_call.1} parent=1 // pred_check_branch
      %34 = sbr.rel (0) target = $region13
    $region12: #{tpu_custom_call.1} parent=1 // pred_region
      _
    $region13: #{tpu_custom_call.1} parent=1 // pred_fallthru
      _
    // Predicated region
    $region14: #{tpu_custom_call.1} parent=1 // pred_check
      _
    $region15: #{tpu_custom_call.1} parent=1 // pred_check_branch
      %36 = sbr.rel (0) target = $region17
    $region16: #{tpu_custom_call.1} parent=1 // pred_region
      %37 = dma.done [#allocation3], 128
    $region17: #{tpu_custom_call.1} parent=1 // pred_fallthru
      _
    // Predicated region
    $region18: #{tpu_custom_call.1} parent=1 // pred_check
      _
    $region19: #{tpu_custom_call.1} parent=1 // pred_check_branch
      %39 = sbr.rel (0) target = $region21
    $region20: #{tpu_custom_call.1} parent=1 // pred_region
      %40 = dma.done [#allocation6], 2048
    $region21: #{tpu_custom_call.1} parent=1 // pred_fallthru
      _
    %v41 = vld [vmem:[#allocation2] sm:$0xff]
    %v42 = vld [vmem:[#allocation5] sm:$0xff]
    %v43 = vld [vmem:[#allocation5 + $0x8] sm:$0xff]
    %v44 = vld [vmem:[#allocation5 + $0x10] sm:$0xff]
    %v45 = vld [vmem:[#allocation5 + $0x18] sm:$0xff]
    %v46 = vld [vmem:[#allocation5 + $0x20] sm:$0xff]
    %v47 = vld [vmem:[#allocation5 + $0x28] sm:$0xff]
    %v48 = vld [vmem:[#allocation5 + $0x30] sm:$0xff]
    %v49 = vld [vmem:[#allocation5 + $0x38] sm:$0xff]
    %v50 = vld [vmem:[#allocation5 + $0x40] sm:$0xff]
    %v51 = vld [vmem:[#allocation5 + $0x48] sm:$0xff]
    %v52 = vld [vmem:[#allocation5 + $0x50] sm:$0xff]
    %v53 = vld [vmem:[#allocation5 + $0x58] sm:$0xff]
    %v54 = vld [vmem:[#allocation5 + $0x60] sm:$0xff]
    %v55 = vld [vmem:[#allocation5 + $0x68] sm:$0xff]
    %v56 = vld [vmem:[#allocation5 + $0x70] sm:$0xff]
    %v57 = vld [vmem:[#allocation5 + $0x78] sm:$0xff]
    %v58 = vld [vmem:[%s2] sm:$0x1]
    %v60 = vlaneseq
    %v61 = vshrl.u32 %v60, 7
    %v62 = vsub.s32 0, %v61
    %v63 = vrot.slane %v58, %v62
    %65 = vmatprep.subr.mxu0 0.0
    %66 = vmatpush1.msra.mxu0 %v42
    %67 = vmatprep.subr.mxu0 0.0
    %68 = vmatpush1.msra.mxu0 %v43
    %69 = vmatprep.subr.mxu0 0.0
    %70 = vmatpush1.msra.mxu0 %v44
    %71 = vmatprep.subr.mxu0 0.0
    %72 = vmatpush1.msra.mxu0 %v45
    %73 = vmatprep.subr.mxu0 0.0
    %74 = vmatpush1.msra.mxu0 %v46
    %75 = vmatprep.subr.mxu0 0.0
    %76 = vmatpush1.msra.mxu0 %v47
    %77 = vmatprep.subr.mxu0 0.0
    %78 = vmatpush1.msra.mxu0 %v48
    %79 = vmatprep.subr.mxu0 0.0
    %80 = vmatpush1.msra.mxu0 %v49
    %81 = vmatprep.subr.mxu0 0.0
    %82 = vmatpush1.msra.mxu0 %v50
    %83 = vmatprep.subr.mxu0 0.0
    %84 = vmatpush1.msra.mxu0 %v51
    %85 = vmatprep.subr.mxu0 0.0
    %86 = vmatpush1.msra.mxu0 %v52
    %87 = vmatprep.subr.mxu0 0.0
    %88 = vmatpush1.msra.mxu0 %v53
    %89 = vmatprep.subr.mxu0 0.0
    %90 = vmatpush1.msra.mxu0 %v54
    %91 = vmatprep.subr.mxu0 0.0
    %92 = vmatpush1.msra.mxu0 %v55
    %93 = vmatprep.subr.mxu0 0.0
    %94 = vmatpush1.msra.mxu0 %v56
    %95 = vmatprep.subr.mxu0 0.0
    %96 = vmatpush1.msra.mxu0 %v57
    %97 = vmatprep.subr.mxu0 0.0
    %98 = vmatpush1.msra.mxu0 0.0
    %99 = vmatprep.subr.mxu0 0.0
    %100 = vmatpush1.msra.mxu0 0.0
    %101 = vmatprep.subr.mxu0 0.0
    %102 = vmatpush1.msra.mxu0 0.0
    %103 = vmatprep.subr.mxu0 0.0
    %104 = vmatpush1.msra.mxu0 0.0
    %105 = vmatprep.subr.mxu0 0.0
    %106 = vmatpush1.msra.mxu0 0.0
    %107 = vmatprep.subr.mxu0 0.0
    %108 = vmatpush1.msra.mxu0 0.0
    %109 = vmatprep.subr.mxu0 0.0
    %110 = vmatpush1.msra.mxu0 0.0
    %111 = vmatprep.subr.mxu0 0.0
    %112 = vmatpush1.msra.mxu0 0.0
    %113 = vmatprep.subr.mxu0 0.0
    %114 = vmatpush1.msra.mxu0 0.0
    %115 = vmatprep.subr.mxu0 0.0
    %116 = vmatpush1.msra.mxu0 0.0
    %117 = vmatprep.subr.mxu0 0.0
    %118 = vmatpush1.msra.mxu0 0.0
    %119 = vmatprep.subr.mxu0 0.0
    %120 = vmatpush1.msra.mxu0 0.0
    %121 = vmatprep.subr.mxu0 0.0
    %122 = vmatpush1.msra.mxu0 0.0
    %123 = vmatprep.subr.mxu0 0.0
    %124 = vmatpush1.msra.mxu0 0.0
    %125 = vmatprep.subr.mxu0 0.0
    %126 = vmatpush1.msra.mxu0 0.0
    %127 = vmatprep.subr.mxu0 0.0
    %128 = vmatpush1.msra.mxu0 0.0
    %129 = vmatprep.mubr.f32.mxu0 0.0
    %130 = vmatmul.mubr.f32.gmra.mrb[0].mxu0 %v41
    %v131 = vpop.f32.mrb[0].mxu0
    %v132 = vadd.f32 %v63, %v131
    %v133 = vpop.f32.mrb[0].mxu0
    %134 = vdwg.mxu0
    %135 = vst [vmem:[#allocation7] sm:$0xff] %v132
    // Predicated region
    $region22: #{tpu_custom_call.1} parent=1 // pred_check
      _
    $region23: #{tpu_custom_call.1} parent=1 // pred_check_branch
      %137 = sbr.rel (0) target = $region25
    $region24: #{tpu_custom_call.1} parent=1 // pred_region
      %s139 = ssub.s32 128, 128
      %140 = vsyncadd [#allocation4], %s139
      %s142 = sshll.u32 [#allocation7], 4
      %s143 = int_to_ptr.vmem [resolvable:$true] %s142
      %145 = dma.vmem_to_hbm [thread:$0]  %s143, 128, %s3, [#allocation4]
    $region25: #{tpu_custom_call.1} parent=1 // pred_fallthru
      _
    // Predicated region
    $region26: #{tpu_custom_call.1} parent=1 // pred_check
      _
    $region27: #{tpu_custom_call.1} parent=1 // pred_check_branch
      %147 = sbr.rel (0) target = $region29
    $region28: #{tpu_custom_call.1} parent=1 // pred_region
      %148 = dma.done [#allocation4], 128
    $region29: #{tpu_custom_call.1} parent=1 // pred_fallthru
      _
    %149 = vsyncpa [#allocation3], 1
    %150 = vsyncpa [#allocation6], 1
    %151 = vsyncpa [#allocation4], 1

</llo_original>
